<compile_context>
chip_gen: v7x
topology: tpu7x:2x2x1
jax: 0.10.0
libtpu: 0.0.40
codegen_flags: <defaults>
</compile_context>

<pallas_src>
import functools

import jax
import jax.numpy as jnp
from jax.experimental import pallas as pl
from jax.experimental.pallas import tpu as pltpu


KERNEL_SIZE = 3  # Conv1d kernel_size=3, padding=1


def _round_up(x: int, m: int) -> int:
    return ((x + m - 1) // m) * m


def _charcnn_kernel(ids_ref, table_ref, bias_ref, o_ref):
    """One block of flattened (word, position) rows per grid step.

    ids_ref  : (TR, 3)        int32  char id of tap k for each output row
                               (pad sentinel = 3*vocab -> contributes zero)
    table_ref: (3*V, Cout)    f32    fused per-tap tables, row k*V + v = (E @ W_k)[v]
    bias_ref : (1, Cout)      f32    conv bias
    o_ref    : (TR, Cout)     f32    output rows
    """
    n_rows = ids_ref.shape[0]
    v3 = table_ref.shape[0]
    v = v3 // KERNEL_SIZE

    ids = ids_ref[...]                                               # (TR, 3) int32

    # Build the (TR, 3V) one-hot selection matrix: lane (k*V + id_k) set for each tap.
    lane = jax.lax.broadcasted_iota(jnp.int32, (n_rows, v3), 1)
    hit = lane == ids[:, 0:1]
    for k in range(1, KERNEL_SIZE):
        hit = hit | (lane == ids[:, k:k + 1] + k * v)
    onehot = hit.astype(jnp.float32)                                 # (TR, 3V)

    # Single GEMM (K = 3V) == embedding gather + 3-tap conv, accumulated in f32.
    acc = jnp.dot(onehot, table_ref[...], preferred_element_type=jnp.float32)

    # Bias broadcast exactly once per grid step.
    o_ref[...] = (acc + bias_ref[...]).astype(o_ref.dtype)


@functools.partial(jax.jit, static_argnames=("block_rows",))
def charcnn_forward(char_ids, emb_table, conv_w, conv_b, *, block_rows=2048):
    """CharCNN.forward (eval mode).

    char_ids : (B, L) int32 character indices
    emb_table: (V, Cin) float32 embedding table
    conv_w   : (3, Cin, Cout) float32  (tap k, in-channel, out-channel)
               == PyTorch Conv1d weight[co, ci, k] transposed.
    conv_b   : (Cout,) float32
    returns  : (B, L, Cout) float32
    """
    B, L = char_ids.shape
    V, Cin = emb_table.shape
    K, Cin2, Cout = conv_w.shape
    assert K == KERNEL_SIZE and Cin2 == Cin

    # Sentinel id: after the +k*V tap offset it matches no fused-table row -> zero row,
    # which reproduces Conv1d's zero padding exactly.
    pad_id = KERNEL_SIZE * V

    # ---- Tiny XLA-side prep: integer index plumbing + weight fusion only. ----------
    # TODO(synk): training-mode dropout mask not implemented (forward at eval is identity).
    ids_pad = jnp.pad(char_ids.astype(jnp.int32), ((0, 0), (1, 1)),
                      constant_values=pad_id)                        # (B, L+2)
    ids_taps = jnp.stack([ids_pad[:, k:k + L] for k in range(KERNEL_SIZE)],
                         axis=-1)                                    # (B, L, 3)
    ids_taps = ids_taps.reshape(B * L, KERNEL_SIZE)                  # (R, 3)

    # Fused tables: row (k*V + v) = (E @ W_k)[v].  (3V x Cout, a few KiB.)
    fused_t = jnp.einsum("vc,kcd->kvd", emb_table, conv_w)           # (3, V, Cout)
    fused_t = fused_t.reshape(KERNEL_SIZE * V, Cout).astype(jnp.float32)
    bias2d = conv_b.reshape(1, Cout).astype(jnp.float32)

    # ---- Row blocking for the grid. -------------------------------------------------
    R = B * L
    TR = min(int(block_rows), _round_up(R, 8))
    TR = _round_up(TR, 8)                         # sublane-aligned block rows
    n_blocks = pl.cdiv(R, TR)
    R_pad = n_blocks * TR
    if R_pad != R:
        ids_taps = jnp.pad(ids_taps, ((0, R_pad - R), (0, 0)),
                           constant_values=pad_id)

    out = pl.pallas_call(
        _charcnn_kernel,
        out_shape=jax.ShapeDtypeStruct((R_pad, Cout), jnp.float32),
        grid_spec=pltpu.PrefetchScalarGridSpec(
            num_scalar_prefetch=0,
            grid=(n_blocks,),
            in_specs=[
                pl.BlockSpec((TR, KERNEL_SIZE), lambda i: (i, 0)),
                pl.BlockSpec((KERNEL_SIZE * V, Cout), lambda i: (0, 0)),
                pl.BlockSpec((1, Cout), lambda i: (0, 0)),
            ],
            out_specs=pl.BlockSpec((TR, Cout), lambda i: (i, 0)),
        ),
        compiler_params=pltpu.CompilerParams(
            dimension_semantics=("parallel",),
        ),
    )(ids_taps, fused_t, bias2d)

    return out[:R].reshape(B, L, Cout)


def _reference_forward(char_ids, emb_table, conv_w, conv_b):
    """Pure-JAX reference (same math as nn.Conv1d(k=3, pad=1) on gathered embeddings)."""
    x = jnp.take(emb_table, char_ids, axis=0)             # (B, L, Cin)
    xp = jnp.pad(x, ((0, 0), (1, 1), (0, 0)))             # (B, L+2, Cin)
    L = char_ids.shape[1]
    out = conv_b[None, None, :]
    for k in range(KERNEL_SIZE):
        out = out + jnp.einsum("blc,cd->bld", xp[:, k:k + L, :], conv_w[k])
    return out


if __name__ == "__main__":
    # Small, module-consistent shapes.
    batch = 2
    word_len = 8           # characters per word
    char_alphabet_size = 20
    char_emb_dim = 32      # args.char_emb_dim
    char_hidden_dim = 32   # args.char_hidden_dim

    key = jax.random.PRNGKey(0)
    k_ids, k_emb, k_w, k_b = jax.random.split(key, 4)

    # Deterministic parameter init (mirrors random_embedding's uniform(-scale, scale)).
    scale = jnp.sqrt(3.0 / char_emb_dim)
    emb_table = jax.random.uniform(
        k_emb, (char_alphabet_size, char_emb_dim),
        minval=-scale, maxval=scale, dtype=jnp.float32)

    # Conv1d default init ~ U(-1/sqrt(fan_in), 1/sqrt(fan_in)), fan_in = Cin * k.
    bound = 1.0 / jnp.sqrt(char_emb_dim * KERNEL_SIZE)
    conv_w = jax.random.uniform(
        k_w, (KERNEL_SIZE, char_emb_dim, char_hidden_dim),
        minval=-bound, maxval=bound, dtype=jnp.float32)
    conv_b = jax.random.uniform(
        k_b, (char_hidden_dim,), minval=-bound, maxval=bound, dtype=jnp.float32)

    char_ids = jax.random.randint(
        k_ids, (batch, word_len), 0, char_alphabet_size, dtype=jnp.int32)

    out = charcnn_forward(char_ids, emb_table, conv_w, conv_b)
    out = jax.block_until_ready(out)

    ref = _reference_forward(char_ids, emb_table, conv_w, conv_b)
    assert out.shape == (batch, word_len, char_hidden_dim), out.shape
    assert jnp.allclose(out, ref, atol=1e-4, rtol=1e-4), "mismatch vs reference"

    print("KERNEL_OK")
</pallas_src>

<mosaic_0001>
module attributes {stable_mosaic.version = 11 : i64} {
  func.func @_charcnn_kernel(%arg0: i32, %arg1: memref<16x3xi32, #tpu.memory_space<vmem>>, %arg2: memref<60x32xf32, #tpu.memory_space<vmem>>, %arg3: memref<1x32xf32, #tpu.memory_space<vmem>>, %arg4: memref<16x32xf32, #tpu.memory_space<vmem>>) attributes {dimension_semantics = [#tpu.dimension_semantics<parallel>], iteration_bounds = array<i64: 1>, scalar_prefetch = 0 : i64, scratch_operands = 0 : i64, tpu.core_type = #tpu.core_type<tc>, window_params = [{transform_indices = @transform_0, window_bounds = array<i64: 16, 3>}, {pipeline_mode = #tpu.pipeline_mode<synchronous>, transform_indices = @transform_1, window_bounds = array<i64: 60, 32>}, {pipeline_mode = #tpu.pipeline_mode<synchronous>, transform_indices = @transform_2, window_bounds = array<i64: 1, 32>}, {transform_indices = @transform_3, window_bounds = array<i64: 16, 32>}]} {
    %c0 = arith.constant 0 : index
    %c0_0 = arith.constant 0 : index
    %0 = vector.load %arg1[%c0, %c0_0] : memref<16x3xi32, #tpu.memory_space<vmem>>, vector<16x3xi32>
    %1 = tpu.iota {dimensions = array<i32: 1>} : vector<16x60xi32>
    %2 = vector.extract_strided_slice %0 {offsets = [0, 0], sizes = [16, 1], strides = [1, 1]} : vector<16x3xi32> to vector<16x1xi32>
    %3 = vector.broadcast %2 : vector<16x1xi32> to vector<16x60xi32>
    %4 = arith.cmpi eq, %1, %3 : vector<16x60xi32>
    %5 = vector.extract_strided_slice %0 {offsets = [0, 1], sizes = [16, 1], strides = [1, 1]} : vector<16x3xi32> to vector<16x1xi32>
    %c20_i32 = arith.constant 20 : i32
    %6 = vector.broadcast %c20_i32 : i32 to vector<16x1xi32>
    %7 = arith.addi %5, %6 : vector<16x1xi32>
    %8 = vector.broadcast %7 : vector<16x1xi32> to vector<16x60xi32>
    %9 = arith.cmpi eq, %1, %8 : vector<16x60xi32>
    %10 = arith.ori %4, %9 : vector<16x60xi1>
    %11 = vector.extract_strided_slice %0 {offsets = [0, 2], sizes = [16, 1], strides = [1, 1]} : vector<16x3xi32> to vector<16x1xi32>
    %c40_i32 = arith.constant 40 : i32
    %12 = vector.broadcast %c40_i32 : i32 to vector<16x1xi32>
    %13 = arith.addi %11, %12 : vector<16x1xi32>
    %14 = vector.broadcast %13 : vector<16x1xi32> to vector<16x60xi32>
    %15 = arith.cmpi eq, %1, %14 : vector<16x60xi32>
    %16 = arith.ori %10, %15 : vector<16x60xi1>
    %17 = arith.extui %16 : vector<16x60xi1> to vector<16x60xi32>
    %18 = arith.sitofp %17 : vector<16x60xi32> to vector<16x60xf32>
    %c0_1 = arith.constant 0 : index
    %c0_2 = arith.constant 0 : index
    %19 = vector.load %arg2[%c0_1, %c0_2] : memref<60x32xf32, #tpu.memory_space<vmem>>, vector<60x32xf32>
    %cst = arith.constant dense<0.000000e+00> : vector<16x32xf32>
    %20 = tpu.matmul %18, %19, %cst {dimension_numbers = #tpu.dot_dimension_numbers<[1], [0], [0], [1], [0, 0, 1, 1], [], []>} : vector<16x60xf32>, vector<60x32xf32>, vector<16x32xf32> -> vector<16x32xf32>
    %c0_3 = arith.constant 0 : index
    %c0_4 = arith.constant 0 : index
    %21 = vector.load %arg3[%c0_3, %c0_4] : memref<1x32xf32, #tpu.memory_space<vmem>>, vector<1x32xf32>
    %22 = vector.broadcast %21 : vector<1x32xf32> to vector<16x32xf32>
    %23 = arith.addf %20, %22 : vector<16x32xf32>
    %c0_5 = arith.constant 0 : index
    %c0_6 = arith.constant 0 : index
    %24 = vector.load %arg4[%c0_5, %c0_6] : memref<16x32xf32, #tpu.memory_space<vmem>>, vector<16x32xf32>
    tpu.vector_store %arg4[%c0_5, %c0_6], %23 {strides = array<i32>} : memref<16x32xf32, #tpu.memory_space<vmem>>, vector<16x32xf32>,
    return
  }
  func.func @transform_0(%arg0: i32) -> (i32, i32) {
    %c0_i32 = arith.constant 0 : i32
    %c0_i32_0 = arith.constant 0 : i32
    return %arg0, %c0_i32 : i32, i32
  }
  func.func @transform_1(%arg0: i32) -> (i32, i32) {
    %c0_i32 = arith.constant 0 : i32
    %c0_i32_0 = arith.constant 0 : i32
    %c0_i32_1 = arith.constant 0 : i32
    return %c0_i32, %c0_i32_0 : i32, i32
  }
  func.func @transform_2(%arg0: i32) -> (i32, i32) {
    %c0_i32 = arith.constant 0 : i32
    %c0_i32_0 = arith.constant 0 : i32
    %c0_i32_1 = arith.constant 0 : i32
    return %c0_i32, %c0_i32_0 : i32, i32
  }
  func.func @transform_3(%arg0: i32) -> (i32, i32) {
    %c0_i32 = arith.constant 0 : i32
    %c0_i32_0 = arith.constant 0 : i32
    return %arg0, %c0_i32 : i32, i32
  }
}

</mosaic_0001>

<llo_original>
// kernel: charcnn_forward.1
$region0: #{charcnn_forward.1}
  #allocation0 [shape = 'u32[]', space=smem, size = 0x4, offset = 0x4, fixed_abs, tag = 'smem constant byte address 0x4 - core index']
  #allocation1 [shape = 'u32[144,128]{1,0:T(1,128)}', space=vmem, size = 0x12000, scoped, tag = 'internal scratch']
  %s0 = inlined_call_operand.vmem [shape: s32[16,3], index: 0, kind: input, shape index: {}]
  %s1 = inlined_call_operand.vmem [shape: f32[60,32], index: 1, kind: input, shape index: {}]
  %s2 = inlined_call_operand.vmem [shape: f32[1,32], index: 2, kind: input, shape index: {}]
  %s3 = inlined_call_operand.hbm [shape: f32[16,32], index: 3, kind: output, shape index: {}]
  %s4 = sld [smem:[#allocation0]]
  $region22: #{charcnn_forward.1} parent=0
    _
  %s6 = ssub.s32 1, %s4
  %s7 = scalar_select 0, %s6, %s4
  $region1: #{charcnn_forward.1} parent=0
    #allocation2 [shape = 'u8[8192]{0}', space=vmem, size = 0x2000, scoped, tag = 'output window, operand 0, single buffered']
    #allocation3 [shape = 's32[1]{0}', space=sflag, size = 0x4, scoped, tag = 'scoped memory for charcnn_forward.1']
    %8 = vsyncpa [#allocation3], 0
    // Predicated region
    $region2: #{charcnn_forward.1} parent=1 // pred_check
      _
    $region3: #{charcnn_forward.1} parent=1 // pred_check_branch
      %10 = sbr.rel (0) target = $region5
    $region4: #{charcnn_forward.1} parent=1 // pred_region
      _
    $region5: #{charcnn_forward.1} parent=1 // pred_fallthru
      _
    // Predicated region
    $region6: #{charcnn_forward.1} parent=1 // pred_check
      _
    $region7: #{charcnn_forward.1} parent=1 // pred_check_branch
      %12 = sbr.rel (0) target = $region9
    $region8: #{charcnn_forward.1} parent=1 // pred_region
      _
    $region9: #{charcnn_forward.1} parent=1 // pred_fallthru
      _
    // Predicated region
    $region10: #{charcnn_forward.1} parent=1 // pred_check
      _
    $region11: #{charcnn_forward.1} parent=1 // pred_check_branch
      %14 = sbr.rel (0) target = $region13
    $region12: #{charcnn_forward.1} parent=1 // pred_region
      _
    $region13: #{charcnn_forward.1} parent=1 // pred_fallthru
      _
    %v15 = vld [vmem:[%s0] sm:$0xff]
    %v16 = vld [vmem:[%s0 + $0x8] sm:$0xff]
    %v17 = vlaneseq
    %v18 = vand.u32 %v17, 127
    %19 = vset.pattern.permute.xlu0 0
    %20 = vperm.xlu0 %19, %v15
    %v21 = vpop.permute.xlu0 %20
    %22 = vset.pattern.permute.xlu0 0
    %23 = vperm.xlu0 %22, %v16
    %v24 = vpop.permute.xlu0 %23
    %vm25 = vcmp.eq.s32.totalorder %v18, %v21
    %vm26 = vcmp.eq.s32.totalorder %v18, %v24
    %v27 = vadd.s32 %v15, 20
    %v28 = vadd.s32 %v16, 20
    %29 = vset.pattern.permute.xlu0 1
    %30 = vperm.xlu0 %29, %v27
    %v31 = vpop.permute.xlu0 %30
    %32 = vset.pattern.permute.xlu0 1
    %33 = vperm.xlu0 %32, %v28
    %v34 = vpop.permute.xlu0 %33
    %vm35 = vcmp.eq.s32.totalorder %v18, %v31
    %vm36 = vcmp.eq.s32.totalorder %v18, %v34
    %vm37 = vmor %vm25, %vm35
    %vm38 = vmor %vm26, %vm36
    %v39 = vadd.s32 %v15, 40
    %v40 = vadd.s32 %v16, 40
    %41 = vset.pattern.permute.xlu0 2
    %42 = vperm.xlu0 %41, %v39
    %v43 = vpop.permute.xlu0 %42
    %44 = vset.pattern.permute.xlu0 2
    %45 = vperm.xlu0 %44, %v40
    %v46 = vpop.permute.xlu0 %45
    %vm47 = vcmp.eq.s32.totalorder %v18, %v43
    %vm48 = vcmp.eq.s32.totalorder %v18, %v46
    %vm49 = vmor %vm37, %vm47
    %vm50 = vmor %vm38, %vm48
    %v51 = vsel %vm49, 1, 0
    %v52 = vsel %vm50, 1, 0
    %v53 = vcvt.s32.f32 %v51
    %v54 = vcvt.s32.f32 %v52
    %v55 = vld [vmem:[%s1] sm:$0xff]
    %v56 = vld [vmem:[%s1 + $0x8] sm:$0xff]
    %v57 = vld [vmem:[%s1 + $0x10] sm:$0xff]
    %v58 = vld [vmem:[%s1 + $0x18] sm:$0xff]
    %v59 = vld [vmem:[%s1 + $0x20] sm:$0xff]
    %v60 = vld [vmem:[%s1 + $0x28] sm:$0xff]
    %v61 = vld [vmem:[%s1 + $0x30] sm:$0xff]
    %v62 = vld [vmem:[%s1 + $0x38] sm:$0xf]
    %v63 = vld [vmem:[%s2] sm:$0x1]
    %v65 = vlaneseq
    %v66 = vshrl.u32 %v65, 7
    %v67 = vsub.s32 0, %v66
    %v68 = vrot.slane %v63, %v67
    %vm70 = vcmask 490496
    %v72 = vsel %vm70, %v53, 0
    %v75 = vsel %vm70, %v54, 0
    %vm77 = vcmask 1043456
    %v79 = vsel %vm77, %v62, 0
    %81 = vmatprep.subr.mxu0 0.0
    %82 = vmatpush1.msra.mxu0 %v55
    %83 = vmatprep.subr.mxu0 0.0
    %84 = vmatpush1.msra.mxu0 %v56
    %85 = vmatprep.subr.mxu0 0.0
    %86 = vmatpush1.msra.mxu0 %v57
    %87 = vmatprep.subr.mxu0 0.0
    %88 = vmatpush1.msra.mxu0 %v58
    %89 = vmatprep.subr.mxu0 0.0
    %90 = vmatpush1.msra.mxu0 %v59
    %91 = vmatprep.subr.mxu0 0.0
    %92 = vmatpush1.msra.mxu0 %v60
    %93 = vmatprep.subr.mxu0 0.0
    %94 = vmatpush1.msra.mxu0 %v61
    %95 = vmatprep.subr.mxu0 0.0
    %96 = vmatpush1.msra.mxu0 %v79
    %97 = vmatprep.subr.mxu0 0.0
    %98 = vmatpush1.msra.mxu0 0.0
    %99 = vmatprep.subr.mxu0 0.0
    %100 = vmatpush1.msra.mxu0 0.0
    %101 = vmatprep.subr.mxu0 0.0
    %102 = vmatpush1.msra.mxu0 0.0
    %103 = vmatprep.subr.mxu0 0.0
    %104 = vmatpush1.msra.mxu0 0.0
    %105 = vmatprep.subr.mxu0 0.0
    %106 = vmatpush1.msra.mxu0 0.0
    %107 = vmatprep.subr.mxu0 0.0
    %108 = vmatpush1.msra.mxu0 0.0
    %109 = vmatprep.subr.mxu0 0.0
    %110 = vmatpush1.msra.mxu0 0.0
    %111 = vmatprep.subr.mxu0 0.0
    %112 = vmatpush1.msra.mxu0 0.0
    %113 = vmatprep.subr.mxu0 0.0
    %114 = vmatpush1.msra.mxu0 0.0
    %115 = vmatprep.subr.mxu0 0.0
    %116 = vmatpush1.msra.mxu0 0.0
    %117 = vmatprep.subr.mxu0 0.0
    %118 = vmatpush1.msra.mxu0 0.0
    %119 = vmatprep.subr.mxu0 0.0
    %120 = vmatpush1.msra.mxu0 0.0
    %121 = vmatprep.subr.mxu0 0.0
    %122 = vmatpush1.msra.mxu0 0.0
    %123 = vmatprep.subr.mxu0 0.0
    %124 = vmatpush1.msra.mxu0 0.0
    %125 = vmatprep.subr.mxu0 0.0
    %126 = vmatpush1.msra.mxu0 0.0
    %127 = vmatprep.subr.mxu0 0.0
    %128 = vmatpush1.msra.mxu0 0.0
    %129 = vmatprep.subr.mxu0 0.0
    %130 = vmatpush1.msra.mxu0 0.0
    %131 = vmatprep.subr.mxu0 0.0
    %132 = vmatpush1.msra.mxu0 0.0
    %133 = vmatprep.subr.mxu0 0.0
    %134 = vmatpush1.msra.mxu0 0.0
    %135 = vmatprep.subr.mxu0 0.0
    %136 = vmatpush1.msra.mxu0 0.0
    %137 = vmatprep.subr.mxu0 0.0
    %138 = vmatpush1.msra.mxu0 0.0
    %139 = vmatprep.subr.mxu0 0.0
    %140 = vmatpush1.msra.mxu0 0.0
    %141 = vmatprep.subr.mxu0 0.0
    %142 = vmatpush1.msra.mxu0 0.0
    %143 = vmatprep.subr.mxu0 0.0
    %144 = vmatpush1.msra.mxu0 0.0
    %145 = vmatprep.mubr.f32.mxu0 0.0
    %146 = vmatmul.mubr.f32.gmra.mrb[0].mxu0 %v72
    %v147 = vpop.f32.mrb[0].mxu0
    %v148 = vadd.f32 %v68, %v147
    %v149 = vpop.f32.mrb[0].mxu0
    %150 = vmatprep.mubr.f32.mxu0 0.0
    %151 = vmatmul.mubr.f32.gmra.mrb[0].mxu0 %v75
    %v152 = vpop.f32.mrb[0].mxu0
    %v153 = vadd.f32 %v68, %v152
    %v154 = vpop.f32.mrb[0].mxu0
    %155 = vdwg.mxu0
    %vm156 = vcmask 261120
    %157 = vst.msk [vmem:[#allocation2] sm:$0xff] %vm156, %v148
    %158 = vst.msk [vmem:[#allocation2 + $0x8] sm:$0xff] %vm156, %v153
    // Predicated region
    $region14: #{charcnn_forward.1} parent=1 // pred_check
      _
    $region15: #{charcnn_forward.1} parent=1 // pred_check_branch
      %160 = sbr.rel (0) target = $region17
    $region16: #{charcnn_forward.1} parent=1 // pred_region
      %s162 = ssub.s32 256, 256
      %163 = vsyncadd [#allocation3], %s162
      %s164 = sshll.u32 [#allocation2], 4
      %s165 = int_to_ptr.vmem [resolvable:$true] %s164
      %170 = dma.vmem_to_hbm [thread:$0]  %s165, 256, %s3, [#allocation3], 128, 128, 8
    $region17: #{charcnn_forward.1} parent=1 // pred_fallthru
      _
    // Predicated region
    $region18: #{charcnn_forward.1} parent=1 // pred_check
      _
    $region19: #{charcnn_forward.1} parent=1 // pred_check_branch
      %172 = sbr.rel (0) target = $region21
    $region20: #{charcnn_forward.1} parent=1 // pred_region
      %173 = dma.done [#allocation3], 256
    $region21: #{charcnn_forward.1} parent=1 // pred_fallthru
      _
    %174 = vsyncpa [#allocation3], 1

</llo_original>
